<compile_context>
chip_gen: v7x
topology: tpu7x:2x2x1
jax: 0.10.0
libtpu: 0.0.40
codegen_flags: <defaults>
</compile_context>

<pallas_src>
import math

import jax
import jax.numpy as jnp
from jax import lax
from jax.experimental import pallas as pl
from jax.experimental.pallas import tpu as pltpu

# ---- module hyper-parameters (mirror PRM.__init__ defaults used here) --------
DILATIONS = (1, 2, 3)
DOWNSAMPLE_RATIO = 2                     # stride
KERNEL_SIZE = 3
IN_CHANS = 3
EMBED_DIM = 64
N_DIL = len(DILATIONS)
OUT_CHANS = EMBED_DIM * N_DIL            # op == 'cat'

K_DIL = KERNEL_SIZE * KERNEL_SIZE * IN_CHANS     # 27 taps per dilation
K_CAT = N_DIL * K_DIL                            # 81 block-diag contraction dim

_INV_SQRT2 = 0.7071067811865476


def _paddings():
    return tuple(
        math.ceil(((KERNEL_SIZE - 1) * d + 1 - DOWNSAMPLE_RATIO) / 2)
        for d in DILATIONS)


# ---- in-kernel exact GELU -----------------------------------------------------
# erf via Abramowitz & Stegun 7.1.26 (|err| < 1.5e-7).  The 1/(1+a*|u|) divide
# is moved off the VALU: EUP approximate reciprocal + one Newton refinement.
def _gelu_exact(x):
    u = x * _INV_SQRT2
    au = jnp.abs(u)
    den = 1.0 + 0.3275911 * au
    r = pl.reciprocal(den, approx=True)
    r = r * (2.0 - den * r)                    # one Newton step: ~f32-accurate
    poly = r * (0.254829592 + r * (-0.284496736 + r * (1.421413741
             + r * (-1.453152027 + r * 1.061405429))))
    erf_au = 1.0 - poly * jnp.exp(-au * au)    # exp runs on the EUP
    erf_u = jnp.where(u < 0.0, -erf_au, erf_au)
    return 0.5 * x * (1.0 + erf_u)


# ---- Pallas kernel: one token tile --------------------------------------------
def _prm_kernel(p_ref, wh_ref, wl_ref, b_ref, o_ref):
    """(TM, K_CAT) @ (K_CAT, OUT_CHANS) block-diag matmul (bf16_3x) + bias + GELU."""
    x = p_ref[...]                                        # (TM, K_CAT) f32
    x_hi = x.astype(jnp.bfloat16)
    x_lo = (x - x_hi.astype(jnp.float32)).astype(jnp.bfloat16)
    wh = wh_ref[...]                                      # (K_CAT, OUT_CHANS) bf16
    wl = wl_ref[...]
    # bf16_3x: hi*hi + lo*hi + hi*lo, accumulated in f32 (xl@wl term negligible)
    acc = jnp.dot(x_hi, wh, preferred_element_type=jnp.float32)
    acc = acc + jnp.dot(x_lo, wh, preferred_element_type=jnp.float32)
    acc = acc + jnp.dot(x_hi, wl, preferred_element_type=jnp.float32)
    acc = acc + b_ref[...]
    o_ref[...] = _gelu_exact(acc).astype(o_ref.dtype)


# ---- wrapper-side im2col (lane-minor layout) -----------------------------------
def _build_patches(x):
    """x: (B, C, H, W) f32 -> ((B*Ho*Wo, K_CAT) patches, Ho, Wo).

    One NCHW->NHWC transpose at input size, one shared max-halo pad, then each
    tap is a strided (B, Ho, Wo, C) slice; all taps of all dilations are
    concatenated along the last (lane) axis in (dilation, ky, kx, C) order.
    """
    B, C, H, W = x.shape
    k, s = KERNEL_SIZE, DOWNSAMPLE_RATIO
    pads = _paddings()
    pmax = max(pads)

    Ho = (H + 2 * pads[0] - DILATIONS[0] * (k - 1) - 1) // s + 1
    Wo = (W + 2 * pads[0] - DILATIONS[0] * (k - 1) - 1) // s + 1
    for d, p in zip(DILATIONS, pads):           # all dilations agree by design
        assert (H + 2 * p - d * (k - 1) - 1) // s + 1 == Ho
        assert (W + 2 * p - d * (k - 1) - 1) // s + 1 == Wo

    x_nhwc = jnp.transpose(x, (0, 2, 3, 1))                      # (B, H, W, C)
    xp = jnp.pad(x_nhwc, ((0, 0), (pmax, pmax), (pmax, pmax), (0, 0)))

    taps = []
    for d, p in zip(DILATIONS, pads):
        off = pmax - p                         # shift inside the shared halo
        for ky in range(k):
            for kx in range(k):
                y0 = off + ky * d
                x0 = off + kx * d
                taps.append(lax.slice(
                    xp,
                    (0, y0, x0, 0),
                    (B, y0 + (Ho - 1) * s + 1, x0 + (Wo - 1) * s + 1, C),
                    (1, s, s, 1)))                               # (B, Ho, Wo, C)
    patches = jnp.concatenate(taps, axis=-1)                     # (B, Ho, Wo, K_CAT)
    return patches.reshape(B * Ho * Wo, K_CAT), Ho, Wo


def _choose_tm(M):
    """Token tile: multiple-of-8 divisor of M (no tail padding), up to 2048 rows
    (~4.4 MiB double-buffered working set -> fits every generation's default
    scoped VMEM), preferring >= 2 grid steps so v7x megacore can split rows."""
    if M % 8 != 0:
        return None
    cap = min(M, 2048)
    best = 8
    tm = 8
    while tm <= cap:
        if M % tm == 0:
            best = tm
        tm += 8
    if best == M and M >= 16 and (M // 2) % 8 == 0:
        best = M // 2                          # keep the grid >= 2 steps
    return best


def pack_params(weights, biases):
    """Precompute (once, outside jit) the block-diagonal weight hi/lo halves and
    the concatenated bias row.  K order per dilation is (ky, kx, C) to match the
    lane-minor patch layout."""
    wblk = jnp.zeros((K_CAT, OUT_CHANS), jnp.float32)
    for i, w in enumerate(weights):                       # w: (E, C, k, k)
        wm = jnp.transpose(w, (2, 3, 1, 0)).reshape(K_DIL, EMBED_DIM)
        wblk = wblk.at[i * K_DIL:(i + 1) * K_DIL,
                       i * EMBED_DIM:(i + 1) * EMBED_DIM].set(wm)
    w_hi = wblk.astype(jnp.bfloat16)
    w_lo = (wblk - w_hi.astype(jnp.float32)).astype(jnp.bfloat16)
    bias_row = jnp.concatenate(biases).reshape(1, OUT_CHANS).astype(jnp.float32)
    return w_hi, w_lo, bias_row


@jax.jit
def prm_forward(x, w_hi, w_lo, bias_row):
    """x: (B, C_in, H, W) f32; w_hi/w_lo: (K_CAT, OUT_CHANS) bf16; bias_row:
    (1, OUT_CHANS) f32.  Returns (B, Ho, Wo, N_DIL*EMBED_DIM) f32, matching
    PRM.forward's output layout."""
    B = x.shape[0]
    patches, Ho, Wo = _build_patches(x)
    M = B * Ho * Wo

    TM = _choose_tm(M)
    Mp = M
    if TM is None:                       # ragged M fallback: pad the tail only
        TM = min(1024, ((M + 7) // 8) * 8)
        Mp = pl.cdiv(M, TM) * TM
        patches = jnp.pad(patches, ((0, Mp - M), (0, 0)))

    out = pl.pallas_call(
        _prm_kernel,
        out_shape=jax.ShapeDtypeStruct((Mp, OUT_CHANS), jnp.float32),
        grid_spec=pltpu.PrefetchScalarGridSpec(
            num_scalar_prefetch=0,
            grid=(Mp // TM,),
            in_specs=[
                pl.BlockSpec((TM, K_CAT), lambda i: (i, 0)),
                pl.BlockSpec((K_CAT, OUT_CHANS), lambda i: (0, 0)),
                pl.BlockSpec((K_CAT, OUT_CHANS), lambda i: (0, 0)),
                pl.BlockSpec((1, OUT_CHANS), lambda i: (0, 0)),
            ],
            out_specs=pl.BlockSpec((TM, OUT_CHANS), lambda i: (i, 0)),
        ),
        compiler_params=pltpu.CompilerParams(
            dimension_semantics=("parallel",)),
    )(patches, w_hi, w_lo, bias_row)

    if Mp != M:
        out = out[:M]
    return out.reshape(B, Ho, Wo, OUT_CHANS)


# ---- pure-JAX reference mirroring the PyTorch forward (for verification) ------
def _reference(x, weights, biases):
    pads = _paddings()
    outs = []
    for w, b, d, p in zip(weights, biases, DILATIONS, pads):
        y = lax.conv_general_dilated(
            x, w,
            window_strides=(DOWNSAMPLE_RATIO, DOWNSAMPLE_RATIO),
            padding=[(p, p), (p, p)],
            rhs_dilation=(d, d),
            dimension_numbers=("NCHW", "OIHW", "NCHW"),
            precision=lax.Precision.HIGHEST)
        y = y + b[None, :, None, None]
        outs.append(jax.nn.gelu(y, approximate=False))          # exact erf-GELU
    y = jnp.stack(outs, axis=-1)                                # (B, E, Ho, Wo, N)
    B, E, Ho, Wo, N = y.shape
    return jnp.transpose(y, (0, 2, 3, 4, 1)).reshape(B, Ho, Wo, N * E)


if __name__ == "__main__":
    key = jax.random.PRNGKey(0)
    keys = jax.random.split(key, 1 + 2 * N_DIL)

    B, H, W = 2, 16, 16
    x = jax.random.normal(keys[0], (B, IN_CHANS, H, W), dtype=jnp.float32)

    # Deterministic parameter init (Conv2d weights + biases, small scale).
    weights = tuple(
        0.05 * jax.random.normal(
            keys[1 + i], (EMBED_DIM, IN_CHANS, KERNEL_SIZE, KERNEL_SIZE),
            jnp.float32)
        for i in range(N_DIL))
    biases = tuple(
        0.05 * jax.random.normal(keys[1 + N_DIL + i], (EMBED_DIM,), jnp.float32)
        for i in range(N_DIL))

    # Block-diagonal weight / bias packing is done once, outside the jit path.
    w_hi, w_lo, bias_row = pack_params(weights, biases)

    out = jax.block_until_ready(prm_forward(x, w_hi, w_lo, bias_row))
    ref = _reference(x, weights, biases)

    Ho = Wo = H // DOWNSAMPLE_RATIO
    assert out.shape == (B, Ho, Wo, OUT_CHANS), out.shape
    assert jnp.allclose(out, ref, atol=1e-4, rtol=1e-4), (
        "mismatch vs reference, max abs err = "
        + str(float(jnp.max(jnp.abs(out - ref)))))

    print("KERNEL_OK")
</pallas_src>

<mosaic_0001>
module attributes {stable_mosaic.version = 11 : i64} {
  func.func @_prm_kernel(%arg0: i32, %arg1: memref<64x81xf32, #tpu.memory_space<vmem>>, %arg2: memref<81x192xbf16, #tpu.memory_space<vmem>>, %arg3: memref<81x192xbf16, #tpu.memory_space<vmem>>, %arg4: memref<1x192xf32, #tpu.memory_space<vmem>>, %arg5: memref<64x192xf32, #tpu.memory_space<vmem>>) attributes {dimension_semantics = [#tpu.dimension_semantics<parallel>], iteration_bounds = array<i64: 2>, scalar_prefetch = 0 : i64, scratch_operands = 0 : i64, tpu.core_type = #tpu.core_type<tc>, window_params = [{transform_indices = @transform_0, window_bounds = array<i64: 64, 81>}, {pipeline_mode = #tpu.pipeline_mode<synchronous>, transform_indices = @transform_1, window_bounds = array<i64: 81, 192>}, {pipeline_mode = #tpu.pipeline_mode<synchronous>, transform_indices = @transform_2, window_bounds = array<i64: 81, 192>}, {pipeline_mode = #tpu.pipeline_mode<synchronous>, transform_indices = @transform_3, window_bounds = array<i64: 1, 192>}, {transform_indices = @transform_4, window_bounds = array<i64: 64, 192>}]} {
    %c0 = arith.constant 0 : index
    %c0_0 = arith.constant 0 : index
    %0 = vector.load %arg1[%c0, %c0_0] : memref<64x81xf32, #tpu.memory_space<vmem>>, vector<64x81xf32>
    %1 = arith.truncf %0 : vector<64x81xf32> to vector<64x81xbf16>
    %2 = arith.extf %1 : vector<64x81xbf16> to vector<64x81xf32>
    %3 = arith.subf %0, %2 : vector<64x81xf32>
    %4 = arith.truncf %3 : vector<64x81xf32> to vector<64x81xbf16>
    %c0_1 = arith.constant 0 : index
    %c0_2 = arith.constant 0 : index
    %5 = vector.load %arg2[%c0_1, %c0_2] : memref<81x192xbf16, #tpu.memory_space<vmem>>, vector<81x192xbf16>
    %c0_3 = arith.constant 0 : index
    %c0_4 = arith.constant 0 : index
    %6 = vector.load %arg3[%c0_3, %c0_4] : memref<81x192xbf16, #tpu.memory_space<vmem>>, vector<81x192xbf16>
    %cst = arith.constant dense<0.000000e+00> : vector<64x192xf32>
    %7 = tpu.matmul %1, %5, %cst {dimension_numbers = #tpu.dot_dimension_numbers<[1], [0], [0], [1], [0, 0, 1, 1], [], []>} : vector<64x81xbf16>, vector<81x192xbf16>, vector<64x192xf32> -> vector<64x192xf32>
    %cst_5 = arith.constant dense<0.000000e+00> : vector<64x192xf32>
    %8 = tpu.matmul %4, %5, %cst_5 {dimension_numbers = #tpu.dot_dimension_numbers<[1], [0], [0], [1], [0, 0, 1, 1], [], []>} : vector<64x81xbf16>, vector<81x192xbf16>, vector<64x192xf32> -> vector<64x192xf32>
    %9 = arith.addf %7, %8 : vector<64x192xf32>
    %cst_6 = arith.constant dense<0.000000e+00> : vector<64x192xf32>
    %10 = tpu.matmul %1, %6, %cst_6 {dimension_numbers = #tpu.dot_dimension_numbers<[1], [0], [0], [1], [0, 0, 1, 1], [], []>} : vector<64x81xbf16>, vector<81x192xbf16>, vector<64x192xf32> -> vector<64x192xf32>
    %11 = arith.addf %9, %10 : vector<64x192xf32>
    %c0_7 = arith.constant 0 : index
    %c0_8 = arith.constant 0 : index
    %12 = vector.load %arg4[%c0_7, %c0_8] : memref<1x192xf32, #tpu.memory_space<vmem>>, vector<1x192xf32>
    %13 = vector.broadcast %12 : vector<1x192xf32> to vector<64x192xf32>
    %14 = arith.addf %11, %13 : vector<64x192xf32>
    %cst_9 = arith.constant 0.707106769 : f32
    %15 = vector.broadcast %cst_9 : f32 to vector<64x192xf32>
    %16 = arith.mulf %14, %15 : vector<64x192xf32>
    %17 = math.absf %16 : vector<64x192xf32>
    %cst_10 = arith.constant 0.327591091 : f32
    %18 = vector.broadcast %cst_10 : f32 to vector<64x192xf32>
    %19 = arith.mulf %18, %17 : vector<64x192xf32>
    %cst_11 = arith.constant 1.000000e+00 : f32
    %20 = vector.broadcast %cst_11 : f32 to vector<64x192xf32>
    %21 = arith.addf %20, %19 : vector<64x192xf32>
    %22 = tpu.reciprocal %21 {approx = true} : vector<64x192xf32> -> vector<64x192xf32>
    %23 = arith.mulf %21, %22 : vector<64x192xf32>
    %cst_12 = arith.constant 2.000000e+00 : f32
    %24 = vector.broadcast %cst_12 : f32 to vector<64x192xf32>
    %25 = arith.subf %24, %23 : vector<64x192xf32>
    %26 = arith.mulf %22, %25 : vector<64x192xf32>
    %cst_13 = arith.constant 1.06140542 : f32
    %27 = vector.broadcast %cst_13 : f32 to vector<64x192xf32>
    %28 = arith.mulf %26, %27 : vector<64x192xf32>
    %cst_14 = arith.constant -1.45315206 : f32
    %29 = vector.broadcast %cst_14 : f32 to vector<64x192xf32>
    %30 = arith.addf %29, %28 : vector<64x192xf32>
    %31 = arith.mulf %26, %30 : vector<64x192xf32>
    %cst_15 = arith.constant 1.42141378 : f32
    %32 = vector.broadcast %cst_15 : f32 to vector<64x192xf32>
    %33 = arith.addf %32, %31 : vector<64x192xf32>
    %34 = arith.mulf %26, %33 : vector<64x192xf32>
    %cst_16 = arith.constant -0.284496725 : f32
    %35 = vector.broadcast %cst_16 : f32 to vector<64x192xf32>
    %36 = arith.addf %35, %34 : vector<64x192xf32>
    %37 = arith.mulf %26, %36 : vector<64x192xf32>
    %cst_17 = arith.constant 0.254829586 : f32
    %38 = vector.broadcast %cst_17 : f32 to vector<64x192xf32>
    %39 = arith.addf %38, %37 : vector<64x192xf32>
    %40 = arith.mulf %26, %39 : vector<64x192xf32>
    %cst_18 = arith.constant 0.000000e+00 : f32
    %41 = vector.broadcast %cst_18 : f32 to vector<64x192xf32>
    %42 = arith.subf %41, %17 : vector<64x192xf32>
    %43 = arith.mulf %42, %17 : vector<64x192xf32>
    %44 = math.exp %43 : vector<64x192xf32>
    %45 = arith.mulf %40, %44 : vector<64x192xf32>
    %cst_19 = arith.constant 1.000000e+00 : f32
    %46 = vector.broadcast %cst_19 : f32 to vector<64x192xf32>
    %47 = arith.subf %46, %45 : vector<64x192xf32>
    %cst_20 = arith.constant 0.000000e+00 : f32
    %48 = vector.broadcast %cst_20 : f32 to vector<64x192xf32>
    %49 = arith.cmpf olt, %16, %48 : vector<64x192xf32>
    %cst_21 = arith.constant 0.000000e+00 : f32
    %50 = vector.broadcast %cst_21 : f32 to vector<64x192xf32>
    %51 = arith.subf %50, %47 : vector<64x192xf32>
    %52 = arith.select %49, %51, %47 : vector<64x192xi1>, vector<64x192xf32>
    %cst_22 = arith.constant 5.000000e-01 : f32
    %53 = vector.broadcast %cst_22 : f32 to vector<64x192xf32>
    %54 = arith.mulf %53, %14 : vector<64x192xf32>
    %cst_23 = arith.constant 1.000000e+00 : f32
    %55 = vector.broadcast %cst_23 : f32 to vector<64x192xf32>
    %56 = arith.addf %55, %52 : vector<64x192xf32>
    %57 = arith.mulf %54, %56 : vector<64x192xf32>
    %c0_24 = arith.constant 0 : index
    %c0_25 = arith.constant 0 : index
    %58 = vector.load %arg5[%c0_24, %c0_25] : memref<64x192xf32, #tpu.memory_space<vmem>>, vector<64x192xf32>
    tpu.vector_store %arg5[%c0_24, %c0_25], %57 {strides = array<i32>} : memref<64x192xf32, #tpu.memory_space<vmem>>, vector<64x192xf32>,
    return
  }
  func.func @transform_0(%arg0: i32) -> (i32, i32) {
    %c0_i32 = arith.constant 0 : i32
    %c0_i32_0 = arith.constant 0 : i32
    return %arg0, %c0_i32 : i32, i32
  }
  func.func @transform_1(%arg0: i32) -> (i32, i32) {
    %c0_i32 = arith.constant 0 : i32
    %c0_i32_0 = arith.constant 0 : i32
    %c0_i32_1 = arith.constant 0 : i32
    return %c0_i32, %c0_i32_0 : i32, i32
  }
  func.func @transform_2(%arg0: i32) -> (i32, i32) {
    %c0_i32 = arith.constant 0 : i32
    %c0_i32_0 = arith.constant 0 : i32
    %c0_i32_1 = arith.constant 0 : i32
    return %c0_i32, %c0_i32_0 : i32, i32
  }
  func.func @transform_3(%arg0: i32) -> (i32, i32) {
    %c0_i32 = arith.constant 0 : i32
    %c0_i32_0 = arith.constant 0 : i32
    %c0_i32_1 = arith.constant 0 : i32
    return %c0_i32, %c0_i32_0 : i32, i32
  }
  func.func @transform_4(%arg0: i32) -> (i32, i32) {
    %c0_i32 = arith.constant 0 : i32
    %c0_i32_0 = arith.constant 0 : i32
    return %arg0, %c0_i32 : i32, i32
  }
}

</mosaic_0001>

<llo_original>
// kernel: prm_forward.1
$region0: #{prm_forward.1}
  #allocation0 [shape = 'u32[]', space=smem, size = 0x4, offset = 0x4, fixed_abs, tag = 'smem constant byte address 0x4 - core index']
  #allocation1 [shape = 'u32[144,128]{1,0:T(1,128)}', space=vmem, size = 0x12000, scoped, tag = 'internal scratch']
  %s0 = inlined_call_operand.vmem [shape: f32[128,81], index: 0, kind: input, shape index: {}]
  %s1 = inlined_call_operand.vmem [shape: bf16[81,192], index: 1, kind: input, shape index: {}]
  %s2 = inlined_call_operand.vmem [shape: bf16[81,192], index: 2, kind: input, shape index: {}]
  %s3 = inlined_call_operand.vmem [shape: f32[1,192], index: 3, kind: input, shape index: {}]
  %s4 = inlined_call_operand.hbm [shape: f32[128,192], index: 4, kind: output, shape index: {}]
  %s5 = sld [smem:[#allocation0]]
  $region49: #{prm_forward.1} parent=0
    _
  %s7 = ssub.s32 1, %s5
  %s8 = scalar_select 0, %s7, %s5
  $region1: #{prm_forward.1} parent=0
    #allocation2 [shape = 'u8[131072]{0}', space=vmem, size = 0x20000, scoped, tag = 'output window, operand 0']
    #allocation3 [shape = 's32[2]{0}', space=sflag, size = 0x8, scoped, tag = 'scoped memory for prm_forward.1']
    %9 = vsyncpa [#allocation3], 0
    %s10 = scalar_lea.sflag [#allocation3], 1
    %11 = vsyncpa %s10, 0
    loop: start=0, step=1, limit=4
    $region2: #{prm_forward.1} parent=1 // loop_pre_header
      _
    $region3: #{prm_forward.1} parent=1 // loop_header
      %s13 = sphi 0, %s17
      %p14 = scmp.ge.s32.totalorder %s13, 4
      %s23 = sphi 0, %s25
      %s26 = sphi 0, %s23
      %s27 = sphi 0, %s26
      %s43 = sphi 0, %s27
      %s47 = sphi 0, %s47
      %s49 = sphi 0, %s47
      %s50 = sphi 0, %s49
      %s64 = sphi 0, %s50
      %s68 = sphi 0, %s68
      %s70 = sphi 0, %s68
      %s71 = sphi 0, %s70
      %s85 = sphi 0, %s71
      %s89 = sphi 0, %s89
      %s91 = sphi 0, %s89
      %s92 = sphi 0, %s91
      %s106 = sphi 0, %s92
      %s112 = sphi 0, %s114
      %s115 = sphi 0, %s112
      %s116 = sphi 0, %s115
      %s132 = sphi 0, %s116
    $region4: #{prm_forward.1} parent=1 // loop_header_branch
      %16 = sbr.rel (%p14) target = $region8
    $region5: #{prm_forward.1} parent=1 // loop_body
      %s18 = ssub.s32 %s13, 1
      %s19 = ssub.s32 %s13, 2
      %s20 = sadd.s32 %s13, 1
      %s21 = ssub.s32 %s13, %s20
      %p22 = scmp.eq.s32.totalorder %s21, 0
      %s24 = sadd.s32 %s23, 1
      %s25 = scalar_select %p22, %s23, %s24
      %p28 = pneg %p22
      %p29 = scmp.eq.s32.totalorder %s13, 1
      %p30 = por %p28, %p29
      %p31 = scmp.ne.s32.totalorder %s23, %s26
      %p32 = scmp.eq.s32.totalorder %s13, 0
      %p33 = por %p31, %p32
      %p34 = scmp.ne.s32.totalorder %s23, %s26
      %p35 = scmp.eq.s32.totalorder %s18, 1
      %p36 = por %p34, %p35
      %p37 = scmp.ne.s32.totalorder %s26, %s27
      %p38 = scmp.eq.s32.totalorder %s18, 0
      %p39 = por %p37, %p38
      %p40 = scmp.ne.s32.totalorder %s26, %s27
      %p41 = scmp.eq.s32.totalorder %s19, 1
      %p42 = por %p40, %p41
      %p44 = scmp.ne.s32.totalorder %s27, %s43
      %p45 = scmp.eq.s32.totalorder %s19, 0
      %p46 = por %p44, %p45
      %s48 = sadd.s32 %s47, 1
      %p51 = scmp.eq.s32.totalorder %s13, 1
      %p52 = scmp.ne.s32.totalorder %s47, %s49
      %p53 = scmp.eq.s32.totalorder %s13, 0
      %p54 = por %p52, %p53
      %p55 = scmp.ne.s32.totalorder %s47, %s49
      %p56 = scmp.eq.s32.totalorder %s18, 1
      %p57 = por %p55, %p56
      %p58 = scmp.ne.s32.totalorder %s49, %s50
      %p59 = scmp.eq.s32.totalorder %s18, 0
      %p60 = por %p58, %p59
      %p61 = scmp.ne.s32.totalorder %s49, %s50
      %p62 = scmp.eq.s32.totalorder %s19, 1
      %p63 = por %p61, %p62
      %p65 = scmp.ne.s32.totalorder %s50, %s64
      %p66 = scmp.eq.s32.totalorder %s19, 0
      %p67 = por %p65, %p66
      %s69 = sadd.s32 %s68, 1
      %p72 = scmp.eq.s32.totalorder %s13, 1
      %p73 = scmp.ne.s32.totalorder %s68, %s70
      %p74 = scmp.eq.s32.totalorder %s13, 0
      %p75 = por %p73, %p74
      %p76 = scmp.ne.s32.totalorder %s68, %s70
      %p77 = scmp.eq.s32.totalorder %s18, 1
      %p78 = por %p76, %p77
      %p79 = scmp.ne.s32.totalorder %s70, %s71
      %p80 = scmp.eq.s32.totalorder %s18, 0
      %p81 = por %p79, %p80
      %p82 = scmp.ne.s32.totalorder %s70, %s71
      %p83 = scmp.eq.s32.totalorder %s19, 1
      %p84 = por %p82, %p83
      %p86 = scmp.ne.s32.totalorder %s71, %s85
      %p87 = scmp.eq.s32.totalorder %s19, 0
      %p88 = por %p86, %p87
      %s90 = sadd.s32 %s89, 1
      %p93 = scmp.eq.s32.totalorder %s13, 1
      %p94 = scmp.ne.s32.totalorder %s89, %s91
      %p95 = scmp.eq.s32.totalorder %s13, 0
      %p96 = por %p94, %p95
      %p97 = scmp.ne.s32.totalorder %s89, %s91
      %p98 = scmp.eq.s32.totalorder %s18, 1
      %p99 = por %p97, %p98
      %p100 = scmp.ne.s32.totalorder %s91, %s92
      %p101 = scmp.eq.s32.totalorder %s18, 0
      %p102 = por %p100, %p101
      %p103 = scmp.ne.s32.totalorder %s91, %s92
      %p104 = scmp.eq.s32.totalorder %s19, 1
      %p105 = por %p103, %p104
      %p107 = scmp.ne.s32.totalorder %s92, %s106
      %p108 = scmp.eq.s32.totalorder %s19, 0
      %p109 = por %p107, %p108
      %s110 = ssub.s32 %s13, %s20
      %p111 = scmp.eq.s32.totalorder %s110, 0
      %s113 = sadd.s32 %s112, 1
      %s114 = scalar_select %p111, %s112, %s113
      %p117 = pneg %p111
      %p118 = scmp.eq.s32.totalorder %s13, 1
      %p119 = por %p117, %p118
      %p120 = scmp.ne.s32.totalorder %s112, %s115
      %p121 = scmp.eq.s32.totalorder %s13, 0
      %p122 = por %p120, %p121
      %p123 = scmp.ne.s32.totalorder %s112, %s115
      %p124 = scmp.eq.s32.totalorder %s18, 1
      %p125 = por %p123, %p124
      %p126 = scmp.ne.s32.totalorder %s115, %s116
      %p127 = scmp.eq.s32.totalorder %s18, 0
      %p128 = por %p126, %p127
      %p129 = scmp.ne.s32.totalorder %s115, %s116
      %p130 = scmp.eq.s32.totalorder %s19, 1
      %p131 = por %p129, %p130
      %p133 = scmp.ne.s32.totalorder %s116, %s132
      %p134 = scmp.eq.s32.totalorder %s19, 0
      %p135 = por %p133, %p134
      %p136 = scmp.le.s32.totalorder 1, %s13
      %p137 = scmp.lt.s32.totalorder %s13, 3
      %p138 = pnand %p136, %p137
      %p139 = pneg %p138
      // Predicated region
      $region9: #{prm_forward.1} parent=5 // pred_check
        _
      $region10: #{prm_forward.1} parent=5 // pred_check_branch
        %141 = sbr.rel (%p138) target = $region12
      $region11: #{prm_forward.1} parent=5 // pred_region
        %s142 = ssub.s32 %s13, 1
        // Predicated region
        $region13: #{prm_forward.1} parent=11 // pred_check
          %p143 = pneg %p60
        $region14: #{prm_forward.1} parent=11 // pred_check_branch
          %145 = sbr.rel (%p143) target = $region16
        $region15: #{prm_forward.1} parent=11 // pred_region
          _
        $region16: #{prm_forward.1} parent=11 // pred_fallthru
          _
        // Predicated region
        $region17: #{prm_forward.1} parent=11 // pred_check
          %p146 = pneg %p81
        $region18: #{prm_forward.1} parent=11 // pred_check_branch
          %148 = sbr.rel (%p146) target = $region20
        $region19: #{prm_forward.1} parent=11 // pred_region
          _
        $region20: #{prm_forward.1} parent=11 // pred_fallthru
          _
        // Predicated region
        $region21: #{prm_forward.1} parent=11 // pred_check
          %p149 = pneg %p102
        $region22: #{prm_forward.1} parent=11 // pred_check_branch
          %151 = sbr.rel (%p149) target = $region24
        $region23: #{prm_forward.1} parent=11 // pred_region
          _
        $region24: #{prm_forward.1} parent=11 // pred_fallthru
          _
      $region12: #{prm_forward.1} parent=5 // pred_fallthru
        _
      %p152 = scmp.lt.s32.totalorder %s13, 2
      // Predicated region
      $region25: #{prm_forward.1} parent=5 // pred_check
        %p153 = pneg %p152
      $region26: #{prm_forward.1} parent=5 // pred_check_branch
        %155 = sbr.rel (%p153) target = $region28
      $region27: #{prm_forward.1} parent=5 // pred_region
        // Predicated region
        $region29: #{prm_forward.1} parent=27 // pred_check
          %p156 = pneg %p33
        $region30: #{prm_forward.1} parent=27 // pred_check_branch
          %158 = sbr.rel (%p156) target = $region32
        $region31: #{prm_forward.1} parent=27 // pred_region
          %s159 = smul.u32 8, %s13
          %p160 = scmp.lt.s32.totalorder %s159, 15
          %s161 = scalar_select %p160, %s159, 15
          %s162 = smul.addr %s161, 8
          %s163 = scalar_lea.vmem %s0, %s162
          %s164 = smul.u32 8, %s13
        $region32: #{prm_forward.1} parent=27 // pred_fallthru
          _
      $region28: #{prm_forward.1} parent=5 // pred_fallthru
        _
      %p165 = scmp.le.s32.totalorder 1, %s13
      %p166 = scmp.lt.s32.totalorder %s13, 3
      %p167 = pnand %p165, %p166
      %p168 = pneg %p167
      // Predicated region
      $region33: #{prm_forward.1} parent=5 // pred_check
        _
      $region34: #{prm_forward.1} parent=5 // pred_check_branch
        %170 = sbr.rel (%p167) target = $region36
      $region35: #{prm_forward.1} parent=5 // pred_region
        %s171 = ssub.s32 %s13, 1
        %s172 = smul.u32 8, %s18
        %p173 = scmp.lt.s32.totalorder %s172, 15
        %s174 = scalar_select %p173, %s172, 15
        %s175 = smul.addr %s174, 8
        %s176 = scalar_lea.vmem %s0, %s175
        %p177 = pneg %p39
        %p178 = pneg %p36
        %p179 = pneg %p60
        %p180 = pneg %p57
        %p181 = pneg %p81
        %p182 = pneg %p78
        %p183 = pneg %p102
        %p184 = pneg %p99
        %p185 = pneg %p128
        %p186 = pneg %p125
        %s187 = sand.u32 %s115, 1
        %s188 = scalar_lea.sflag [#allocation3], %s187
        %s189 = sand.u32 %s115, 1
        %s190 = smul.addr %s189, 128
        %s191 = scalar_lea.vmem [#allocation2], %s190
        %s192 = smul.u32 8, %s18
        %p193 = scmp.lt.s32.totalorder %s192, 15
        %s194 = scalar_select %p193, %s192, 15
        %s195 = smul.addr %s194, 8
        %s196 = scalar_lea.vmem %s0, %s195
        %s197 = smul.u32 8, %s18
        %s198 = smul.u32 8, %s18
        %v200 = vld [vmem:[%s196] sm:$0xff]
        %v201 = vld [vmem:[%s196 + $0x8] sm:$0xff]
        %v202 = vld [vmem:[%s196 + $0x10] sm:$0xff]
        %v203 = vld [vmem:[%s196 + $0x18] sm:$0xff]
        %v204 = vld [vmem:[%s196 + $0x20] sm:$0xff]
        %v205 = vld [vmem:[%s196 + $0x28] sm:$0xff]
        %v206 = vld [vmem:[%s196 + $0x30] sm:$0xff]
        %v207 = vld [vmem:[%s196 + $0x38] sm:$0xff]
        %v208 = vpack.c.bf16 %v201, %v200
        %v209 = vpack.c.bf16 %v203, %v202
        %v210 = vpack.c.bf16 %v205, %v204
        %v211 = vpack.c.bf16 %v207, %v206
        %v212 = vunpack.c.l.bf16 %v208
        %v213 = vunpack.c.h.bf16 %v208
        %v214 = vunpack.c.l.bf16 %v209
        %v215 = vunpack.c.h.bf16 %v209
        %v216 = vunpack.c.l.bf16 %v210
        %v217 = vunpack.c.h.bf16 %v210
        %v218 = vunpack.c.l.bf16 %v211
        %v219 = vunpack.c.h.bf16 %v211
        %v220 = vsub.f32 %v200, %v212
        %v221 = vsub.f32 %v201, %v213
        %v222 = vsub.f32 %v202, %v214
        %v223 = vsub.f32 %v203, %v215
        %v224 = vsub.f32 %v204, %v216
        %v225 = vsub.f32 %v205, %v217
        %v226 = vsub.f32 %v206, %v218
        %v227 = vsub.f32 %v207, %v219
        %v228 = vpack.c.bf16 %v221, %v220
        %v229 = vpack.c.bf16 %v223, %v222
        %v230 = vpack.c.bf16 %v225, %v224
        %v231 = vpack.c.bf16 %v227, %v226
        %v232 = vld [vmem:[%s1] sm:$0xff]
        %v233 = vld [vmem:[%s1 + $0x8] sm:$0xff]
        %v234 = vld [vmem:[%s1 + $0x10] sm:$0xff]
        %v235 = vld [vmem:[%s1 + $0x18] sm:$0xff]
        %v236 = vld [vmem:[%s1 + $0x20] sm:$0xff]
        %v237 = vld [vmem:[%s1 + $0x28] sm:$0xff]
        %v238 = vld [vmem:[%s1 + $0x30] sm:$0xff]
        %v239 = vld [vmem:[%s1 + $0x38] sm:$0xff]
        %v240 = vld [vmem:[%s1 + $0x40] sm:$0xff]
        %v241 = vld [vmem:[%s1 + $0x48] sm:$0xff]
        %v242 = vld [vmem:[%s1 + $0x50] sm:$0x11]
        %v243 = vld [vmem:[%s2] sm:$0xff]
        %v244 = vld [vmem:[%s2 + $0x8] sm:$0xff]
        %v245 = vld [vmem:[%s2 + $0x10] sm:$0xff]
        %v246 = vld [vmem:[%s2 + $0x18] sm:$0xff]
        %v247 = vld [vmem:[%s2 + $0x20] sm:$0xff]
        %v248 = vld [vmem:[%s2 + $0x28] sm:$0xff]
        %v249 = vld [vmem:[%s2 + $0x30] sm:$0xff]
        %v250 = vld [vmem:[%s2 + $0x38] sm:$0xff]
        %v251 = vld [vmem:[%s2 + $0x40] sm:$0xff]
        %v252 = vld [vmem:[%s2 + $0x48] sm:$0xff]
        %v253 = vld [vmem:[%s2 + $0x50] sm:$0x11]
        %v265 = vunpack.c.l.b16 %v232
        %v266 = vunpack.c.h.b16 %v232
        %v267 = vunpack.c.l.b16 %v233
        %v268 = vunpack.c.h.b16 %v233
        %v269 = vunpack.c.l.b16 %v234
        %v270 = vunpack.c.h.b16 %v234
        %v271 = vunpack.c.l.b16 %v235
        %v272 = vunpack.c.h.b16 %v235
        %v273 = vunpack.c.l.b16 %v236
        %v274 = vunpack.c.h.b16 %v236
        %v275 = vunpack.c.l.b16 %v237
        %v276 = vunpack.c.h.b16 %v237
        %v277 = vunpack.c.l.b16 %v238
        %v278 = vunpack.c.h.b16 %v238
        %v279 = vunpack.c.l.b16 %v239
        %v280 = vunpack.c.h.b16 %v239
        %v281 = vunpack.c.l.b16 %v240
        %v282 = vunpack.c.h.b16 %v240
        %v283 = vunpack.c.l.b16 %v241
        %v284 = vunpack.c.h.b16 %v241
        %v285 = vunpack.c.l.b16 %v242
        %v286 = vunpack.c.h.b16 %v242
        %v287 = vpack.c.b16 %v267, %v265
        %v288 = vpack.c.b16 %v268, %v266
        %v289 = vpack.c.b16 %v271, %v269
        %v290 = vpack.c.b16 %v272, %v270
        %v291 = vpack.c.b16 %v275, %v273
        %v292 = vpack.c.b16 %v276, %v274
        %v293 = vpack.c.b16 %v279, %v277
        %v294 = vpack.c.b16 %v280, %v278
        %v295 = vpack.c.b16 %v283, %v281
        %v296 = vpack.c.b16 %v284, %v282
        %v297 = vpack.c.b16 %v285, %v285
        %v298 = vpack.c.b16 %v286, %v286
        %vm309 = vcmask 662528
        %v311 = vsel %vm309, %v228, 0
        %v314 = vsel %vm309, %v229, 0
        %v317 = vsel %vm309, %v230, 0
        %v320 = vsel %vm309, %v231, 0
        %vm322 = vcmask 1040384
        %v323 = vsel 0, 4294967295, 65535
        %v324 = vsel %vm322, %v323, 0
        %v326 = vand.u32 %v297, %v324
        %v329 = vand.u32 %v298, %v324
        %331 = vmatprep.subr.bf16.mxu0 %v288
        %332 = vmatpush1.bf16.msra.mxu0 %v287
        %333 = vmatprep.subr.bf16.mxu0 %v290
        %334 = vmatpush1.bf16.msra.mxu0 %v289
        %335 = vmatprep.subr.bf16.mxu0 %v292
        %336 = vmatpush1.bf16.msra.mxu0 %v291
        %337 = vmatprep.subr.bf16.mxu0 %v294
        %338 = vmatpush1.bf16.msra.mxu0 %v293
        %339 = vmatprep.subr.bf16.mxu0 %v296
        %340 = vmatpush1.bf16.msra.mxu0 %v295
        %341 = vmatprep.subr.bf16.mxu0 %v329
        %342 = vmatpush1.bf16.msra.mxu0 %v326
        %343 = vmatprep.subr.bf16.mxu0 0
        %344 = vmatpush1.bf16.msra.mxu0 0
        %345 = vmatprep.subr.bf16.mxu0 0
        %346 = vmatpush1.bf16.msra.mxu0 0
        %347 = vmatprep.subr.bf16.mxu0 0
        %348 = vmatpush1.bf16.msra.mxu0 0
        %349 = vmatprep.subr.bf16.mxu0 0
        %350 = vmatpush1.bf16.msra.mxu0 0
        %351 = vmatprep.subr.bf16.mxu0 0
        %352 = vmatpush1.bf16.msra.mxu0 0
        %353 = vmatprep.subr.bf16.mxu0 0
        %354 = vmatpush1.bf16.msra.mxu0 0
        %355 = vmatprep.subr.bf16.mxu0 0
        %356 = vmatpush1.bf16.msra.mxu0 0
        %357 = vmatprep.subr.bf16.mxu0 0
        %358 = vmatpush1.bf16.msra.mxu0 0
        %359 = vmatprep.subr.bf16.mxu0 0
        %360 = vmatpush1.bf16.msra.mxu0 0
        %361 = vmatprep.subr.bf16.mxu0 0
        %362 = vmatpush1.bf16.msra.mxu0 0
        %363 = vmatprep.mubr.bf16.mxu0 0
        %364 = vmatmul.mubr.bf16.gmra.mrb[0].mxu0 %v311
        %v365 = vpop.f32.mrb[0].mxu0
        %v366 = vadd.f32 0.0, %v365
        %v367 = vpop.f32.mrb[0].mxu0
        %v368 = vadd.f32 0.0, %v367
        %v369 = vpop.f32.mrb[0].mxu0
        %v370 = vadd.f32 0.0, %v369
        %v371 = vpop.f32.mrb[0].mxu0
        %v372 = vadd.f32 0.0, %v371
        %373 = vmatprep.mubr.bf16.mxu0 0
        %374 = vmatmul.mubr.bf16.gmra.mrb[0].mxu0 %v314
        %v375 = vpop.f32.mrb[0].mxu0
        %v376 = vadd.f32 0.0, %v375
        %v377 = vpop.f32.mrb[0].mxu0
        %v378 = vadd.f32 0.0, %v377
        %v379 = vpop.f32.mrb[0].mxu0
        %v380 = vadd.f32 0.0, %v379
        %v381 = vpop.f32.mrb[0].mxu0
        %v382 = vadd.f32 0.0, %v381
        %383 = vmatprep.mubr.bf16.mxu0 0
        %384 = vmatmul.mubr.bf16.gmra.mrb[0].mxu0 %v317
        %v385 = vpop.f32.mrb[0].mxu0
        %v386 = vadd.f32 0.0, %v385
        %v387 = vpop.f32.mrb[0].mxu0
        %v388 = vadd.f32 0.0, %v387
        %v389 = vpop.f32.mrb[0].mxu0
        %v390 = vadd.f32 0.0, %v389
        %v391 = vpop.f32.mrb[0].mxu0
        %v392 = vadd.f32 0.0, %v391
        %393 = vmatprep.mubr.bf16.mxu0 0
        %394 = vmatmul.mubr.bf16.gmra.mrb[0].mxu0 %v320
        %v395 = vpop.f32.mrb[0].mxu0
        %v396 = vadd.f32 0.0, %v395
        %v397 = vpop.f32.mrb[0].mxu0
        %v398 = vadd.f32 0.0, %v397
        %v399 = vpop.f32.mrb[0].mxu0
        %v400 = vadd.f32 0.0, %v399
        %v401 = vpop.f32.mrb[0].mxu0
        %v402 = vadd.f32 0.0, %v401
        %403 = vdwg.mxu0
        %v405 = vsel %vm309, %v208, 0
        %v408 = vsel %vm309, %v209, 0
        %v411 = vsel %vm309, %v210, 0
        %v414 = vsel %vm309, %v211, 0
        %416 = vmatprep.subr.bf16.mxu0 %v288
        %417 = vmatpush1.bf16.msra.mxu0 %v287
        %418 = vmatprep.subr.bf16.mxu0 %v290
        %419 = vmatpush1.bf16.msra.mxu0 %v289
        %420 = vmatprep.subr.bf16.mxu0 %v292
        %421 = vmatpush1.bf16.msra.mxu0 %v291
        %422 = vmatprep.subr.bf16.mxu0 %v294
        %423 = vmatpush1.bf16.msra.mxu0 %v293
        %424 = vmatprep.subr.bf16.mxu0 %v296
        %425 = vmatpush1.bf16.msra.mxu0 %v295
        %426 = vmatprep.subr.bf16.mxu0 %v329
        %427 = vmatpush1.bf16.msra.mxu0 %v326
        %428 = vmatprep.subr.bf16.mxu0 0
        %429 = vmatpush1.bf16.msra.mxu0 0
        %430 = vmatprep.subr.bf16.mxu0 0
        %431 = vmatpush1.bf16.msra.mxu0 0
        %432 = vmatprep.subr.bf16.mxu0 0
        %433 = vmatpush1.bf16.msra.mxu0 0
        %434 = vmatprep.subr.bf16.mxu0 0
        %435 = vmatpush1.bf16.msra.mxu0 0
        %436 = vmatprep.subr.bf16.mxu0 0
        %437 = vmatpush1.bf16.msra.mxu0 0
        %438 = vmatprep.subr.bf16.mxu0 0
        %439 = vmatpush1.bf16.msra.mxu0 0
        %440 = vmatprep.subr.bf16.mxu0 0
        %441 = vmatpush1.bf16.msra.mxu0 0
        %442 = vmatprep.subr.bf16.mxu0 0
        %443 = vmatpush1.bf16.msra.mxu0 0
        %444 = vmatprep.subr.bf16.mxu0 0
        %445 = vmatpush1.bf16.msra.mxu0 0
        %446 = vmatprep.subr.bf16.mxu0 0
        %447 = vmatpush1.bf16.msra.mxu0 0
        %448 = vmatprep.mubr.bf16.mxu0 0
        %449 = vmatmul.mubr.bf16.gmra.mrb[0].mxu0 %v405
        %v450 = vpop.f32.mrb[0].mxu0
        %v451 = vadd.f32 %v366, %v450
        %v452 = vpop.f32.mrb[0].mxu0
        %v453 = vadd.f32 %v368, %v452
        %v454 = vpop.f32.mrb[0].mxu0
        %v455 = vadd.f32 %v370, %v454
        %v456 = vpop.f32.mrb[0].mxu0
        %v457 = vadd.f32 %v372, %v456
        %458 = vmatprep.mubr.bf16.mxu0 0
        %459 = vmatmul.mubr.bf16.gmra.mrb[0].mxu0 %v408
        %v460 = vpop.f32.mrb[0].mxu0
        %v461 = vadd.f32 %v376, %v460
        %v462 = vpop.f32.mrb[0].mxu0
        %v463 = vadd.f32 %v378, %v462
        %v464 = vpop.f32.mrb[0].mxu0
        %v465 = vadd.f32 %v380, %v464
        %v466 = vpop.f32.mrb[0].mxu0
        %v467 = vadd.f32 %v382, %v466
        %468 = vmatprep.mubr.bf16.mxu0 0
        %469 = vmatmul.mubr.bf16.gmra.mrb[0].mxu0 %v411
        %v470 = vpop.f32.mrb[0].mxu0
        %v471 = vadd.f32 %v386, %v470
        %v472 = vpop.f32.mrb[0].mxu0
        %v473 = vadd.f32 %v388, %v472
        %v474 = vpop.f32.mrb[0].mxu0
        %v475 = vadd.f32 %v390, %v474
        %v476 = vpop.f32.mrb[0].mxu0
        %v477 = vadd.f32 %v392, %v476
        %478 = vmatprep.mubr.bf16.mxu0 0
        %479 = vmatmul.mubr.bf16.gmra.mrb[0].mxu0 %v414
        %v480 = vpop.f32.mrb[0].mxu0
        %v481 = vadd.f32 %v396, %v480
        %v482 = vpop.f32.mrb[0].mxu0
        %v483 = vadd.f32 %v398, %v482
        %v484 = vpop.f32.mrb[0].mxu0
        %v485 = vadd.f32 %v400, %v484
        %v486 = vpop.f32.mrb[0].mxu0
        %v487 = vadd.f32 %v402, %v486
        %488 = vdwg.mxu0
        %v500 = vunpack.c.l.b16 %v243
        %v501 = vunpack.c.h.b16 %v243
        %v502 = vunpack.c.l.b16 %v244
        %v503 = vunpack.c.h.b16 %v244
        %v504 = vunpack.c.l.b16 %v245
        %v505 = vunpack.c.h.b16 %v245
        %v506 = vunpack.c.l.b16 %v246
        %v507 = vunpack.c.h.b16 %v246
        %v508 = vunpack.c.l.b16 %v247
        %v509 = vunpack.c.h.b16 %v247
        %v510 = vunpack.c.l.b16 %v248
        %v511 = vunpack.c.h.b16 %v248
        %v512 = vunpack.c.l.b16 %v249
        %v513 = vunpack.c.h.b16 %v249
        %v514 = vunpack.c.l.b16 %v250
        %v515 = vunpack.c.h.b16 %v250
        %v516 = vunpack.c.l.b16 %v251
        %v517 = vunpack.c.h.b16 %v251
        %v518 = vunpack.c.l.b16 %v252
        %v519 = vunpack.c.h.b16 %v252
        %v520 = vunpack.c.l.b16 %v253
        %v521 = vunpack.c.h.b16 %v253
        %v522 = vpack.c.b16 %v502, %v500
        %v523 = vpack.c.b16 %v503, %v501
        %v524 = vpack.c.b16 %v506, %v504
        %v525 = vpack.c.b16 %v507, %v505
        %v526 = vpack.c.b16 %v510, %v508
        %v527 = vpack.c.b16 %v511, %v509
        %v528 = vpack.c.b16 %v514, %v512
        %v529 = vpack.c.b16 %v515, %v513
        %v530 = vpack.c.b16 %v518, %v516
        %v531 = vpack.c.b16 %v519, %v517
        %v532 = vpack.c.b16 %v520, %v520
        %v533 = vpack.c.b16 %v521, %v521
        %v545 = vand.u32 %v532, %v324
        %v548 = vand.u32 %v533, %v324
        %550 = vmatprep.subr.bf16.mxu0 %v523
        %551 = vmatpush1.bf16.msra.mxu0 %v522
        %552 = vmatprep.subr.bf16.mxu0 %v525
        %553 = vmatpush1.bf16.msra.mxu0 %v524
        %554 = vmatprep.subr.bf16.mxu0 %v527
        %555 = vmatpush1.bf16.msra.mxu0 %v526
        %556 = vmatprep.subr.bf16.mxu0 %v529
        %557 = vmatpush1.bf16.msra.mxu0 %v528
        %558 = vmatprep.subr.bf16.mxu0 %v531
        %559 = vmatpush1.bf16.msra.mxu0 %v530
        %560 = vmatprep.subr.bf16.mxu0 %v548
        %561 = vmatpush1.bf16.msra.mxu0 %v545
        %562 = vmatprep.subr.bf16.mxu0 0
        %563 = vmatpush1.bf16.msra.mxu0 0
        %564 = vmatprep.subr.bf16.mxu0 0
        %565 = vmatpush1.bf16.msra.mxu0 0
        %566 = vmatprep.subr.bf16.mxu0 0
        %567 = vmatpush1.bf16.msra.mxu0 0
        %568 = vmatprep.subr.bf16.mxu0 0
        %569 = vmatpush1.bf16.msra.mxu0 0
        %570 = vmatprep.subr.bf16.mxu0 0
        %571 = vmatpush1.bf16.msra.mxu0 0
        %572 = vmatprep.subr.bf16.mxu0 0
        %573 = vmatpush1.bf16.msra.mxu0 0
        %574 = vmatprep.subr.bf16.mxu0 0
        %575 = vmatpush1.bf16.msra.mxu0 0
        %576 = vmatprep.subr.bf16.mxu0 0
        %577 = vmatpush1.bf16.msra.mxu0 0
        %578 = vmatprep.subr.bf16.mxu0 0
        %579 = vmatpush1.bf16.msra.mxu0 0
        %580 = vmatprep.subr.bf16.mxu0 0
        %581 = vmatpush1.bf16.msra.mxu0 0
        %582 = vmatprep.mubr.bf16.mxu0 0
        %583 = vmatmul.mubr.bf16.gmra.mrb[0].mxu0 %v405
        %v584 = vpop.f32.mrb[0].mxu0
        %v585 = vadd.f32 0.0, %v584
        %v586 = vpop.f32.mrb[0].mxu0
        %v587 = vadd.f32 0.0, %v586
        %v588 = vpop.f32.mrb[0].mxu0
        %v589 = vadd.f32 0.0, %v588
        %v590 = vpop.f32.mrb[0].mxu0
        %v591 = vadd.f32 0.0, %v590
        %592 = vmatprep.mubr.bf16.mxu0 0
        %593 = vmatmul.mubr.bf16.gmra.mrb[0].mxu0 %v408
        %v594 = vpop.f32.mrb[0].mxu0
        %v595 = vadd.f32 0.0, %v594
        %v596 = vpop.f32.mrb[0].mxu0
        %v597 = vadd.f32 0.0, %v596
        %v598 = vpop.f32.mrb[0].mxu0
        %v599 = vadd.f32 0.0, %v598
        %v600 = vpop.f32.mrb[0].mxu0
        %v601 = vadd.f32 0.0, %v600
        %602 = vmatprep.mubr.bf16.mxu0 0
        %603 = vmatmul.mubr.bf16.gmra.mrb[0].mxu0 %v411
        %v604 = vpop.f32.mrb[0].mxu0
        %v605 = vadd.f32 0.0, %v604
        %v606 = vpop.f32.mrb[0].mxu0
        %v607 = vadd.f32 0.0, %v606
        %v608 = vpop.f32.mrb[0].mxu0
        %v609 = vadd.f32 0.0, %v608
        %v610 = vpop.f32.mrb[0].mxu0
        %v611 = vadd.f32 0.0, %v610
        %612 = vmatprep.mubr.bf16.mxu0 0
        %613 = vmatmul.mubr.bf16.gmra.mrb[0].mxu0 %v414
        %v614 = vpop.f32.mrb[0].mxu0
        %v615 = vadd.f32 0.0, %v614
        %v616 = vpop.f32.mrb[0].mxu0
        %v617 = vadd.f32 0.0, %v616
        %v618 = vpop.f32.mrb[0].mxu0
        %v619 = vadd.f32 0.0, %v618
        %v620 = vpop.f32.mrb[0].mxu0
        %v621 = vadd.f32 0.0, %v620
        %622 = vdwg.mxu0
        %v623 = vadd.f32 %v451, %v585
        %v624 = vadd.f32 %v453, %v587
        %v625 = vadd.f32 %v455, %v589
        %v626 = vadd.f32 %v457, %v591
        %v627 = vadd.f32 %v461, %v595
        %v628 = vadd.f32 %v463, %v597
        %v629 = vadd.f32 %v465, %v599
        %v630 = vadd.f32 %v467, %v601
        %v631 = vadd.f32 %v471, %v605
        %v632 = vadd.f32 %v473, %v607
        %v633 = vadd.f32 %v475, %v609
        %v634 = vadd.f32 %v477, %v611
        %v635 = vadd.f32 %v481, %v615
        %v636 = vadd.f32 %v483, %v617
        %v637 = vadd.f32 %v485, %v619
        %v638 = vadd.f32 %v487, %v621
        %v639 = vld [vmem:[%s3] sm:$0x3]
        %v641 = vlaneseq
        %v642 = vshrl.u32 %v641, 7
        %v643 = vsub.s32 0, %v642
        %v644 = vrot.slane %v639, %v643
        %v645 = vlaneseq
        %v646 = vshrl.u32 %v645, 7
        %v647 = vsub.s32 1, %v646
        %v648 = vrot.slane %v639, %v647
        %v651 = vadd.f32 %v623, %v644
        %v652 = vadd.f32 %v624, %v648
        %v653 = vadd.f32 %v625, %v644
        %v654 = vadd.f32 %v626, %v648
        %v655 = vadd.f32 %v627, %v644
        %v656 = vadd.f32 %v628, %v648
        %v657 = vadd.f32 %v629, %v644
        %v658 = vadd.f32 %v630, %v648
        %v659 = vadd.f32 %v631, %v644
        %v660 = vadd.f32 %v632, %v648
        %v661 = vadd.f32 %v633, %v644
        %v662 = vadd.f32 %v634, %v648
        %v663 = vadd.f32 %v635, %v644
        %v664 = vadd.f32 %v636, %v648
        %v665 = vadd.f32 %v637, %v644
        %v666 = vadd.f32 %v638, %v648
        %v667 = vmul.f32 %v651, 0.70710677
        %v668 = vmul.f32 %v652, 0.70710677
        %v669 = vmul.f32 %v653, 0.70710677
        %v670 = vmul.f32 %v654, 0.70710677
        %v671 = vmul.f32 %v655, 0.70710677
        %v672 = vmul.f32 %v656, 0.70710677
        %v673 = vmul.f32 %v657, 0.70710677
        %v674 = vmul.f32 %v658, 0.70710677
        %v675 = vmul.f32 %v659, 0.70710677
        %v676 = vmul.f32 %v660, 0.70710677
        %v677 = vmul.f32 %v661, 0.70710677
        %v678 = vmul.f32 %v662, 0.70710677
        %v679 = vmul.f32 %v663, 0.70710677
        %v680 = vmul.f32 %v664, 0.70710677
        %v681 = vmul.f32 %v665, 0.70710677
        %v682 = vmul.f32 %v666, 0.70710677
        %v683 = vand.u32 2147483647, %v667
        %v684 = vand.u32 2147483647, %v668
        %v685 = vand.u32 2147483647, %v669
        %v686 = vand.u32 2147483647, %v670
        %v687 = vand.u32 2147483647, %v671
        %v688 = vand.u32 2147483647, %v672
        %v689 = vand.u32 2147483647, %v673
        %v690 = vand.u32 2147483647, %v674
        %v691 = vand.u32 2147483647, %v675
        %v692 = vand.u32 2147483647, %v676
        %v693 = vand.u32 2147483647, %v677
        %v694 = vand.u32 2147483647, %v678
        %v695 = vand.u32 2147483647, %v679
        %v696 = vand.u32 2147483647, %v680
        %v697 = vand.u32 2147483647, %v681
        %v698 = vand.u32 2147483647, %v682
        %v699 = vmul.f32 %v683, 0.3275911
        %v700 = vmul.f32 %v684, 0.3275911
        %v701 = vmul.f32 %v685, 0.3275911
        %v702 = vmul.f32 %v686, 0.3275911
        %v703 = vmul.f32 %v687, 0.3275911
        %v704 = vmul.f32 %v688, 0.3275911
        %v705 = vmul.f32 %v689, 0.3275911
        %v706 = vmul.f32 %v690, 0.3275911
        %v707 = vmul.f32 %v691, 0.3275911
        %v708 = vmul.f32 %v692, 0.3275911
        %v709 = vmul.f32 %v693, 0.3275911
        %v710 = vmul.f32 %v694, 0.3275911
        %v711 = vmul.f32 %v695, 0.3275911
        %v712 = vmul.f32 %v696, 0.3275911
        %v713 = vmul.f32 %v697, 0.3275911
        %v714 = vmul.f32 %v698, 0.3275911
        %v715 = vadd.f32 %v699, 1.0
        %v716 = vadd.f32 %v700, 1.0
        %v717 = vadd.f32 %v701, 1.0
        %v718 = vadd.f32 %v702, 1.0
        %v719 = vadd.f32 %v703, 1.0
        %v720 = vadd.f32 %v704, 1.0
        %v721 = vadd.f32 %v705, 1.0
        %v722 = vadd.f32 %v706, 1.0
        %v723 = vadd.f32 %v707, 1.0
        %v724 = vadd.f32 %v708, 1.0
        %v725 = vadd.f32 %v709, 1.0
        %v726 = vadd.f32 %v710, 1.0
        %v727 = vadd.f32 %v711, 1.0
        %v728 = vadd.f32 %v712, 1.0
        %v729 = vadd.f32 %v713, 1.0
        %v730 = vadd.f32 %v714, 1.0
        %v731 = vrcp.pop %v715
        %v732 = vrcp.pop %v716
        %v733 = vrcp.pop %v717
        %v734 = vrcp.pop %v718
        %v735 = vrcp.pop %v719
        %v736 = vrcp.pop %v720
        %v737 = vrcp.pop %v721
        %v738 = vrcp.pop %v722
        %v739 = vrcp.pop %v723
        %v740 = vrcp.pop %v724
        %v741 = vrcp.pop %v725
        %v742 = vrcp.pop %v726
        %v743 = vrcp.pop %v727
        %v744 = vrcp.pop %v728
        %v745 = vrcp.pop %v729
        %v746 = vrcp.pop %v730
        %v747 = vmul.f32 %v715, %v731
        %v748 = vmul.f32 %v716, %v732
        %v749 = vmul.f32 %v717, %v733
        %v750 = vmul.f32 %v718, %v734
        %v751 = vmul.f32 %v719, %v735
        %v752 = vmul.f32 %v720, %v736
        %v753 = vmul.f32 %v721, %v737
        %v754 = vmul.f32 %v722, %v738
        %v755 = vmul.f32 %v723, %v739
        %v756 = vmul.f32 %v724, %v740
        %v757 = vmul.f32 %v725, %v741
        %v758 = vmul.f32 %v726, %v742
        %v759 = vmul.f32 %v727, %v743
        %v760 = vmul.f32 %v728, %v744
        %v761 = vmul.f32 %v729, %v745
        %v762 = vmul.f32 %v730, %v746
        %v763 = vsub.f32 2.0, %v747
        %v764 = vsub.f32 2.0, %v748
        %v765 = vsub.f32 2.0, %v749
        %v766 = vsub.f32 2.0, %v750
        %v767 = vsub.f32 2.0, %v751
        %v768 = vsub.f32 2.0, %v752
        %v769 = vsub.f32 2.0, %v753
        %v770 = vsub.f32 2.0, %v754
        %v771 = vsub.f32 2.0, %v755
        %v772 = vsub.f32 2.0, %v756
        %v773 = vsub.f32 2.0, %v757
        %v774 = vsub.f32 2.0, %v758
        %v775 = vsub.f32 2.0, %v759
        %v776 = vsub.f32 2.0, %v760
        %v777 = vsub.f32 2.0, %v761
        %v778 = vsub.f32 2.0, %v762
        %v779 = vmul.f32 %v731, %v763
        %v780 = vmul.f32 %v732, %v764
        %v781 = vmul.f32 %v733, %v765
        %v782 = vmul.f32 %v734, %v766
        %v783 = vmul.f32 %v735, %v767
        %v784 = vmul.f32 %v736, %v768
        %v785 = vmul.f32 %v737, %v769
        %v786 = vmul.f32 %v738, %v770
        %v787 = vmul.f32 %v739, %v771
        %v788 = vmul.f32 %v740, %v772
        %v789 = vmul.f32 %v741, %v773
        %v790 = vmul.f32 %v742, %v774
        %v791 = vmul.f32 %v743, %v775
        %v792 = vmul.f32 %v744, %v776
        %v793 = vmul.f32 %v745, %v777
        %v794 = vmul.f32 %v746, %v778
        %v795 = vmul.f32 %v779, 1.0614054
        %v796 = vmul.f32 %v780, 1.0614054
        %v797 = vmul.f32 %v781, 1.0614054
        %v798 = vmul.f32 %v782, 1.0614054
        %v799 = vmul.f32 %v783, 1.0614054
        %v800 = vmul.f32 %v784, 1.0614054
        %v801 = vmul.f32 %v785, 1.0614054
        %v802 = vmul.f32 %v786, 1.0614054
        %v803 = vmul.f32 %v787, 1.0614054
        %v804 = vmul.f32 %v788, 1.0614054
        %v805 = vmul.f32 %v789, 1.0614054
        %v806 = vmul.f32 %v790, 1.0614054
        %v807 = vmul.f32 %v791, 1.0614054
        %v808 = vmul.f32 %v792, 1.0614054
        %v809 = vmul.f32 %v793, 1.0614054
        %v810 = vmul.f32 %v794, 1.0614054
        %v811 = vadd.f32 %v795, -1.4531521
        %v812 = vadd.f32 %v796, -1.4531521
        %v813 = vadd.f32 %v797, -1.4531521
        %v814 = vadd.f32 %v798, -1.4531521
        %v815 = vadd.f32 %v799, -1.4531521
        %v816 = vadd.f32 %v800, -1.4531521
        %v817 = vadd.f32 %v801, -1.4531521
        %v818 = vadd.f32 %v802, -1.4531521
        %v819 = vadd.f32 %v803, -1.4531521
        %v820 = vadd.f32 %v804, -1.4531521
        %v821 = vadd.f32 %v805, -1.4531521
        %v822 = vadd.f32 %v806, -1.4531521
        %v823 = vadd.f32 %v807, -1.4531521
        %v824 = vadd.f32 %v808, -1.4531521
        %v825 = vadd.f32 %v809, -1.4531521
        %v826 = vadd.f32 %v810, -1.4531521
        %v827 = vmul.f32 %v779, %v811
        %v828 = vmul.f32 %v780, %v812
        %v829 = vmul.f32 %v781, %v813
        %v830 = vmul.f32 %v782, %v814
        %v831 = vmul.f32 %v783, %v815
        %v832 = vmul.f32 %v784, %v816
        %v833 = vmul.f32 %v785, %v817
        %v834 = vmul.f32 %v786, %v818
        %v835 = vmul.f32 %v787, %v819
        %v836 = vmul.f32 %v788, %v820
        %v837 = vmul.f32 %v789, %v821
        %v838 = vmul.f32 %v790, %v822
        %v839 = vmul.f32 %v791, %v823
        %v840 = vmul.f32 %v792, %v824
        %v841 = vmul.f32 %v793, %v825
        %v842 = vmul.f32 %v794, %v826
        %v843 = vadd.f32 %v827, 1.4214138
        %v844 = vadd.f32 %v828, 1.4214138
        %v845 = vadd.f32 %v829, 1.4214138
        %v846 = vadd.f32 %v830, 1.4214138
        %v847 = vadd.f32 %v831, 1.4214138
        %v848 = vadd.f32 %v832, 1.4214138
        %v849 = vadd.f32 %v833, 1.4214138
        %v850 = vadd.f32 %v834, 1.4214138
        %v851 = vadd.f32 %v835, 1.4214138
        %v852 = vadd.f32 %v836, 1.4214138
        %v853 = vadd.f32 %v837, 1.4214138
        %v854 = vadd.f32 %v838, 1.4214138
        %v855 = vadd.f32 %v839, 1.4214138
        %v856 = vadd.f32 %v840, 1.4214138
        %v857 = vadd.f32 %v841, 1.4214138
        %v858 = vadd.f32 %v842, 1.4214138
        %v859 = vmul.f32 %v779, %v843
        %v860 = vmul.f32 %v780, %v844
        %v861 = vmul.f32 %v781, %v845
        %v862 = vmul.f32 %v782, %v846
        %v863 = vmul.f32 %v783, %v847
        %v864 = vmul.f32 %v784, %v848
        %v865 = vmul.f32 %v785, %v849
        %v866 = vmul.f32 %v786, %v850
        %v867 = vmul.f32 %v787, %v851
        %v868 = vmul.f32 %v788, %v852
        %v869 = vmul.f32 %v789, %v853
        %v870 = vmul.f32 %v790, %v854
        %v871 = vmul.f32 %v791, %v855
        %v872 = vmul.f32 %v792, %v856
        %v873 = vmul.f32 %v793, %v857
        %v874 = vmul.f32 %v794, %v858
        %v875 = vadd.f32 %v859, -0.28449672
        %v876 = vadd.f32 %v860, -0.28449672
        %v877 = vadd.f32 %v861, -0.28449672
        %v878 = vadd.f32 %v862, -0.28449672
        %v879 = vadd.f32 %v863, -0.28449672
        %v880 = vadd.f32 %v864, -0.28449672
        %v881 = vadd.f32 %v865, -0.28449672
        %v882 = vadd.f32 %v866, -0.28449672
        %v883 = vadd.f32 %v867, -0.28449672
        %v884 = vadd.f32 %v868, -0.28449672
        %v885 = vadd.f32 %v869, -0.28449672
        %v886 = vadd.f32 %v870, -0.28449672
        %v887 = vadd.f32 %v871, -0.28449672
        %v888 = vadd.f32 %v872, -0.28449672
        %v889 = vadd.f32 %v873, -0.28449672
        %v890 = vadd.f32 %v874, -0.28449672
        %v891 = vmul.f32 %v779, %v875
        %v892 = vmul.f32 %v780, %v876
        %v893 = vmul.f32 %v781, %v877
        %v894 = vmul.f32 %v782, %v878
        %v895 = vmul.f32 %v783, %v879
        %v896 = vmul.f32 %v784, %v880
        %v897 = vmul.f32 %v785, %v881
        %v898 = vmul.f32 %v786, %v882
        %v899 = vmul.f32 %v787, %v883
        %v900 = vmul.f32 %v788, %v884
        %v901 = vmul.f32 %v789, %v885
        %v902 = vmul.f32 %v790, %v886
        %v903 = vmul.f32 %v791, %v887
        %v904 = vmul.f32 %v792, %v888
        %v905 = vmul.f32 %v793, %v889
        %v906 = vmul.f32 %v794, %v890
        %v907 = vadd.f32 %v891, 0.2548296
        %v908 = vadd.f32 %v892, 0.2548296
        %v909 = vadd.f32 %v893, 0.2548296
        %v910 = vadd.f32 %v894, 0.2548296
        %v911 = vadd.f32 %v895, 0.2548296
        %v912 = vadd.f32 %v896, 0.2548296
        %v913 = vadd.f32 %v897, 0.2548296
        %v914 = vadd.f32 %v898, 0.2548296
        %v915 = vadd.f32 %v899, 0.2548296
        %v916 = vadd.f32 %v900, 0.2548296
        %v917 = vadd.f32 %v901, 0.2548296
        %v918 = vadd.f32 %v902, 0.2548296
        %v919 = vadd.f32 %v903, 0.2548296
        %v920 = vadd.f32 %v904, 0.2548296
        %v921 = vadd.f32 %v905, 0.2548296
        %v922 = vadd.f32 %v906, 0.2548296
        %v923 = vmul.f32 %v779, %v907
        %v924 = vmul.f32 %v780, %v908
        %v925 = vmul.f32 %v781, %v909
        %v926 = vmul.f32 %v782, %v910
        %v927 = vmul.f32 %v783, %v911
        %v928 = vmul.f32 %v784, %v912
        %v929 = vmul.f32 %v785, %v913
        %v930 = vmul.f32 %v786, %v914
        %v931 = vmul.f32 %v787, %v915
        %v932 = vmul.f32 %v788, %v916
        %v933 = vmul.f32 %v789, %v917
        %v934 = vmul.f32 %v790, %v918
        %v935 = vmul.f32 %v791, %v919
        %v936 = vmul.f32 %v792, %v920
        %v937 = vmul.f32 %v793, %v921
        %v938 = vmul.f32 %v794, %v922
        %v939 = vsub.f32 0.0, %v683
        %v940 = vsub.f32 0.0, %v684
        %v941 = vsub.f32 0.0, %v685
        %v942 = vsub.f32 0.0, %v686
        %v943 = vsub.f32 0.0, %v687
        %v944 = vsub.f32 0.0, %v688
        %v945 = vsub.f32 0.0, %v689
        %v946 = vsub.f32 0.0, %v690
        %v947 = vsub.f32 0.0, %v691
        %v948 = vsub.f32 0.0, %v692
        %v949 = vsub.f32 0.0, %v693
        %v950 = vsub.f32 0.0, %v694
        %v951 = vsub.f32 0.0, %v695
        %v952 = vsub.f32 0.0, %v696
        %v953 = vsub.f32 0.0, %v697
        %v954 = vsub.f32 0.0, %v698
        %v955 = vmul.f32 %v939, %v683
        %v956 = vmul.f32 %v940, %v684
        %v957 = vmul.f32 %v941, %v685
        %v958 = vmul.f32 %v942, %v686
        %v959 = vmul.f32 %v943, %v687
        %v960 = vmul.f32 %v944, %v688
        %v961 = vmul.f32 %v945, %v689
        %v962 = vmul.f32 %v946, %v690
        %v963 = vmul.f32 %v947, %v691
        %v964 = vmul.f32 %v948, %v692
        %v965 = vmul.f32 %v949, %v693
        %v966 = vmul.f32 %v950, %v694
        %v967 = vmul.f32 %v951, %v695
        %v968 = vmul.f32 %v952, %v696
        %v969 = vmul.f32 %v953, %v697
        %v970 = vmul.f32 %v954, %v698
        %v971 = vmul.f32 %v955, 1.442695
        %v972 = vpow.pop %v971
        %v973 = vmul.f32 %v956, 1.442695
        %v974 = vpow.pop %v973
        %v975 = vmul.f32 %v957, 1.442695
        %v976 = vpow.pop %v975
        %v977 = vmul.f32 %v958, 1.442695
        %v978 = vpow.pop %v977
        %v979 = vmul.f32 %v959, 1.442695
        %v980 = vpow.pop %v979
        %v981 = vmul.f32 %v960, 1.442695
        %v982 = vpow.pop %v981
        %v983 = vmul.f32 %v961, 1.442695
        %v984 = vpow.pop %v983
        %v985 = vmul.f32 %v962, 1.442695
        %v986 = vpow.pop %v985
        %v987 = vmul.f32 %v963, 1.442695
        %v988 = vpow.pop %v987
        %v989 = vmul.f32 %v964, 1.442695
        %v990 = vpow.pop %v989
        %v991 = vmul.f32 %v965, 1.442695
        %v992 = vpow.pop %v991
        %v993 = vmul.f32 %v966, 1.442695
        %v994 = vpow.pop %v993
        %v995 = vmul.f32 %v967, 1.442695
        %v996 = vpow.pop %v995
        %v997 = vmul.f32 %v968, 1.442695
        %v998 = vpow.pop %v997
        %v999 = vmul.f32 %v969, 1.442695
        %v1000 = vpow.pop %v999
        %v1001 = vmul.f32 %v970, 1.442695
        %v1002 = vpow.pop %v1001
        %v1003 = vmul.f32 %v923, %v972
        %v1004 = vmul.f32 %v924, %v974
        %v1005 = vmul.f32 %v925, %v976
        %v1006 = vmul.f32 %v926, %v978
        %v1007 = vmul.f32 %v927, %v980
        %v1008 = vmul.f32 %v928, %v982
        %v1009 = vmul.f32 %v929, %v984
        %v1010 = vmul.f32 %v930, %v986
        %v1011 = vmul.f32 %v931, %v988
        %v1012 = vmul.f32 %v932, %v990
        %v1013 = vmul.f32 %v933, %v992
        %v1014 = vmul.f32 %v934, %v994
        %v1015 = vmul.f32 %v935, %v996
        %v1016 = vmul.f32 %v936, %v998
        %v1017 = vmul.f32 %v937, %v1000
        %v1018 = vmul.f32 %v938, %v1002
        %v1019 = vsub.f32 1.0, %v1003
        %v1020 = vsub.f32 1.0, %v1004
        %v1021 = vsub.f32 1.0, %v1005
        %v1022 = vsub.f32 1.0, %v1006
        %v1023 = vsub.f32 1.0, %v1007
        %v1024 = vsub.f32 1.0, %v1008
        %v1025 = vsub.f32 1.0, %v1009
        %v1026 = vsub.f32 1.0, %v1010
        %v1027 = vsub.f32 1.0, %v1011
        %v1028 = vsub.f32 1.0, %v1012
        %v1029 = vsub.f32 1.0, %v1013
        %v1030 = vsub.f32 1.0, %v1014
        %v1031 = vsub.f32 1.0, %v1015
        %v1032 = vsub.f32 1.0, %v1016
        %v1033 = vsub.f32 1.0, %v1017
        %v1034 = vsub.f32 1.0, %v1018
        %vm1035 = vcmp.lt.f32.partialorder %v667, 0.0
        %vm1036 = vcmp.lt.f32.partialorder %v668, 0.0
        %vm1037 = vcmp.lt.f32.partialorder %v669, 0.0
        %vm1038 = vcmp.lt.f32.partialorder %v670, 0.0
        %vm1039 = vcmp.lt.f32.partialorder %v671, 0.0
        %vm1040 = vcmp.lt.f32.partialorder %v672, 0.0
        %vm1041 = vcmp.lt.f32.partialorder %v673, 0.0
        %vm1042 = vcmp.lt.f32.partialorder %v674, 0.0
        %vm1043 = vcmp.lt.f32.partialorder %v675, 0.0
        %vm1044 = vcmp.lt.f32.partialorder %v676, 0.0
        %vm1045 = vcmp.lt.f32.partialorder %v677, 0.0
        %vm1046 = vcmp.lt.f32.partialorder %v678, 0.0
        %vm1047 = vcmp.lt.f32.partialorder %v679, 0.0
        %vm1048 = vcmp.lt.f32.partialorder %v680, 0.0
        %vm1049 = vcmp.lt.f32.partialorder %v681, 0.0
        %vm1050 = vcmp.lt.f32.partialorder %v682, 0.0
        %v1051 = vsub.f32 0.0, %v1019
        %v1052 = vsub.f32 0.0, %v1020
        %v1053 = vsub.f32 0.0, %v1021
        %v1054 = vsub.f32 0.0, %v1022
        %v1055 = vsub.f32 0.0, %v1023
        %v1056 = vsub.f32 0.0, %v1024
        %v1057 = vsub.f32 0.0, %v1025
        %v1058 = vsub.f32 0.0, %v1026
        %v1059 = vsub.f32 0.0, %v1027
        %v1060 = vsub.f32 0.0, %v1028
        %v1061 = vsub.f32 0.0, %v1029
        %v1062 = vsub.f32 0.0, %v1030
        %v1063 = vsub.f32 0.0, %v1031
        %v1064 = vsub.f32 0.0, %v1032
        %v1065 = vsub.f32 0.0, %v1033
        %v1066 = vsub.f32 0.0, %v1034
        %v1067 = vsel %vm1035, %v1051, %v1019
        %v1068 = vsel %vm1036, %v1052, %v1020
        %v1069 = vsel %vm1037, %v1053, %v1021
        %v1070 = vsel %vm1038, %v1054, %v1022
        %v1071 = vsel %vm1039, %v1055, %v1023
        %v1072 = vsel %vm1040, %v1056, %v1024
        %v1073 = vsel %vm1041, %v1057, %v1025
        %v1074 = vsel %vm1042, %v1058, %v1026
        %v1075 = vsel %vm1043, %v1059, %v1027
        %v1076 = vsel %vm1044, %v1060, %v1028
        %v1077 = vsel %vm1045, %v1061, %v1029
        %v1078 = vsel %vm1046, %v1062, %v1030
        %v1079 = vsel %vm1047, %v1063, %v1031
        %v1080 = vsel %vm1048, %v1064, %v1032
        %v1081 = vsel %vm1049, %v1065, %v1033
        %v1082 = vsel %vm1050, %v1066, %v1034
        %v1083 = vmul.f32 %v651, 0.5
        %v1084 = vmul.f32 %v652, 0.5
        %v1085 = vmul.f32 %v653, 0.5
        %v1086 = vmul.f32 %v654, 0.5
        %v1087 = vmul.f32 %v655, 0.5
        %v1088 = vmul.f32 %v656, 0.5
        %v1089 = vmul.f32 %v657, 0.5
        %v1090 = vmul.f32 %v658, 0.5
        %v1091 = vmul.f32 %v659, 0.5
        %v1092 = vmul.f32 %v660, 0.5
        %v1093 = vmul.f32 %v661, 0.5
        %v1094 = vmul.f32 %v662, 0.5
        %v1095 = vmul.f32 %v663, 0.5
        %v1096 = vmul.f32 %v664, 0.5
        %v1097 = vmul.f32 %v665, 0.5
        %v1098 = vmul.f32 %v666, 0.5
        %v1099 = vadd.f32 %v1067, 1.0
        %v1100 = vadd.f32 %v1068, 1.0
        %v1101 = vadd.f32 %v1069, 1.0
        %v1102 = vadd.f32 %v1070, 1.0
        %v1103 = vadd.f32 %v1071, 1.0
        %v1104 = vadd.f32 %v1072, 1.0
        %v1105 = vadd.f32 %v1073, 1.0
        %v1106 = vadd.f32 %v1074, 1.0
        %v1107 = vadd.f32 %v1075, 1.0
        %v1108 = vadd.f32 %v1076, 1.0
        %v1109 = vadd.f32 %v1077, 1.0
        %v1110 = vadd.f32 %v1078, 1.0
        %v1111 = vadd.f32 %v1079, 1.0
        %v1112 = vadd.f32 %v1080, 1.0
        %v1113 = vadd.f32 %v1081, 1.0
        %v1114 = vadd.f32 %v1082, 1.0
        %v1115 = vmul.f32 %v1083, %v1099
        %v1116 = vmul.f32 %v1084, %v1100
        %v1117 = vmul.f32 %v1085, %v1101
        %v1118 = vmul.f32 %v1086, %v1102
        %v1119 = vmul.f32 %v1087, %v1103
        %v1120 = vmul.f32 %v1088, %v1104
        %v1121 = vmul.f32 %v1089, %v1105
        %v1122 = vmul.f32 %v1090, %v1106
        %v1123 = vmul.f32 %v1091, %v1107
        %v1124 = vmul.f32 %v1092, %v1108
        %v1125 = vmul.f32 %v1093, %v1109
        %v1126 = vmul.f32 %v1094, %v1110
        %v1127 = vmul.f32 %v1095, %v1111
        %v1128 = vmul.f32 %v1096, %v1112
        %v1129 = vmul.f32 %v1097, %v1113
        %v1130 = vmul.f32 %v1098, %v1114
        %1131 = vst [vmem:[%s191] sm:$0xff] %v1115
        %vm1132 = vcmask 523264
        %1133 = vst.msk [vmem:[%s191 + $0x8] sm:$0xff] %vm1132, %v1116
        %1134 = vst [vmem:[%s191 + $0x10] sm:$0xff] %v1117
        %1135 = vst.msk [vmem:[%s191 + $0x18] sm:$0xff] %vm1132, %v1118
        %1136 = vst [vmem:[%s191 + $0x20] sm:$0xff] %v1119
        %1137 = vst.msk [vmem:[%s191 + $0x28] sm:$0xff] %vm1132, %v1120
        %1138 = vst [vmem:[%s191 + $0x30] sm:$0xff] %v1121
        %1139 = vst.msk [vmem:[%s191 + $0x38] sm:$0xff] %vm1132, %v1122
        %1140 = vst [vmem:[%s191 + $0x40] sm:$0xff] %v1123
        %1141 = vst.msk [vmem:[%s191 + $0x48] sm:$0xff] %vm1132, %v1124
        %1142 = vst [vmem:[%s191 + $0x50] sm:$0xff] %v1125
        %1143 = vst.msk [vmem:[%s191 + $0x58] sm:$0xff] %vm1132, %v1126
        %1144 = vst [vmem:[%s191 + $0x60] sm:$0xff] %v1127
        %1145 = vst.msk [vmem:[%s191 + $0x68] sm:$0xff] %vm1132, %v1128
        %1146 = vst [vmem:[%s191 + $0x70] sm:$0xff] %v1129
        %1147 = vst.msk [vmem:[%s191 + $0x78] sm:$0xff] %vm1132, %v1130
        %s1148 = sand.u32 %s115, 1
        %s1149 = scalar_lea.sflag [#allocation3], %s1148
        %s1150 = sand.u32 %s115, 1
        %s1151 = smul.addr %s1150, 128
        %s1152 = scalar_lea.vmem [#allocation2], %s1151
        // Predicated region
        $region37: #{prm_forward.1} parent=35 // pred_check
          %p1153 = pneg %p125
        $region38: #{prm_forward.1} parent=35 // pred_check_branch
          %1155 = sbr.rel (%p1153) target = $region40
        $region39: #{prm_forward.1} parent=35 // pred_region
          %s1156 = smul.u32 8, %s18
          %s1158 = ssub.s32 2048, 2048
          %1159 = vsyncadd %s1149, %s1158
          %s1160 = smul.addr %s1156, 2
          %s1161 = smul.addr %s1160, 128
          %s1162 = scalar_lea.hbm %s4, %s1161
          %s1163 = sshll.u32 %s1152, 4
          %s1164 = int_to_ptr.vmem [resolvable:$true] %s1163
          %1169 = dma.vmem_to_hbm [thread:$0]  %s1164, 2048, %s1162, %s1149, 256, 256, 16
        $region40: #{prm_forward.1} parent=35 // pred_fallthru
          _
      $region36: #{prm_forward.1} parent=5 // pred_fallthru
        _
      %p1170 = scmp.le.s32.totalorder 2, %s13
      // Predicated region
      $region41: #{prm_forward.1} parent=5 // pred_check
        %p1171 = pneg %p1170
      $region42: #{prm_forward.1} parent=5 // pred_check_branch
        %1173 = sbr.rel (%p1171) target = $region44
      $region43: #{prm_forward.1} parent=5 // pred_region
        %s1174 = ssub.s32 %s13, 2
        // Predicated region
        $region45: #{prm_forward.1} parent=43 // pred_check
          %p1175 = pneg %p131
        $region46: #{prm_forward.1} parent=43 // pred_check_branch
          %1177 = sbr.rel (%p1175) target = $region48
        $region47: #{prm_forward.1} parent=43 // pred_region
          %s1178 = sand.u32 %s116, 1
          %s1179 = scalar_lea.sflag [#allocation3], %s1178
          %s1180 = sand.u32 %s116, 1
          %s1181 = smul.addr %s1180, 128
          %s1182 = scalar_lea.vmem [#allocation2], %s1181
          %1183 = dma.done %s1179, 2048
        $region48: #{prm_forward.1} parent=43 // pred_fallthru
          _
      $region44: #{prm_forward.1} parent=5 // pred_fallthru
        _
    $region6: #{prm_forward.1} parent=1 // loop_footer
      %s17 = sadd.s32 1, %s13
    $region7: #{prm_forward.1} parent=1 // loop_footer_branch
      %12 = sbr.rel target = $region3
    $region8: #{prm_forward.1} parent=1 // loop_exit
      _
    %1184 = vsyncpa [#allocation3], 1
    %s1185 = scalar_lea.sflag [#allocation3], 1
    %1186 = vsyncpa %s1185, 1

</llo_original>
